<compile_context>
chip_gen: v7x
topology: tpu7x:2x2x1
jax: 0.10.0
libtpu: 0.0.40
codegen_flags: <defaults>
</compile_context>

<pallas_src>
import functools

import jax
import jax.numpy as jnp
from jax.experimental import pallas as pl
from jax.experimental.pallas import tpu as pltpu

_HIDDEN = 64        # original hidden width of the module
_HIDDEN_PAD = 128   # lane-dense hidden width (zero-padded; exact no-op math)
_OUT_PAD = 128      # lane-dense output width (zero-padded, sliced off in the wrapper)


def _dqn_kernel(x_ref, w1_ref, b1_ref, w2_ref, b2_ref, w3_ref, b3_ref, o_ref):
    # One batch tile per grid step. Weights/biases have constant block indices so they
    # stay resident in VMEM; x/o tiles stream and are double-buffered by Pallas.
    x = x_ref[...]
    # MXU matmuls accumulate in f32; bias-add + ReLU run in f32 on the VPU.
    h1 = jnp.dot(x, w1_ref[...], preferred_element_type=jnp.float32) + b1_ref[...]
    h1 = jnp.maximum(h1, 0.0).astype(w2_ref.dtype)
    h2 = jnp.dot(h1, w2_ref[...], preferred_element_type=jnp.float32) + b2_ref[...]
    h2 = jnp.maximum(h2, 0.0).astype(w3_ref.dtype)
    # Lane-dense (128-wide) output store — no masked partial stores.
    o_ref[...] = jnp.dot(h2, w3_ref[...], preferred_element_type=jnp.float32) + b3_ref[...]


def _round_up(n, m):
    return ((n + m - 1) // m) * m


@functools.partial(jax.jit, static_argnames=("compute_dtype", "block_batch"))
def deep_qnetwork_forward(x, w1, b1, w2, b2, w3, b3, *,
                          compute_dtype=jnp.bfloat16, block_batch=512):
    batch, dim_states = x.shape
    dim_actions = w3.shape[1]

    # ---- zero-pad hidden/output feature dims to 128 (exact: pads contribute 0) ----
    w1p = jnp.zeros((dim_states, _HIDDEN_PAD), jnp.float32).at[:, :_HIDDEN].set(w1)
    b1p = jnp.zeros((1, _HIDDEN_PAD), jnp.float32).at[:, :_HIDDEN].set(b1)
    w2p = jnp.zeros((_HIDDEN_PAD, _HIDDEN_PAD), jnp.float32).at[:_HIDDEN, :_HIDDEN].set(w2)
    b2p = jnp.zeros((1, _HIDDEN_PAD), jnp.float32).at[:, :_HIDDEN].set(b2)
    w3p = jnp.zeros((_HIDDEN_PAD, _OUT_PAD), jnp.float32).at[:_HIDDEN, :dim_actions].set(w3)
    b3p = jnp.zeros((1, _OUT_PAD), jnp.float32).at[:, :dim_actions].set(b3)

    # MXU inputs in compute_dtype (bf16 default); biases stay f32 (added to f32 acc).
    xc = x.astype(compute_dtype)
    w1c = w1p.astype(compute_dtype)
    w2c = w2p.astype(compute_dtype)
    w3c = w3p.astype(compute_dtype)

    # ---- batch tiling (TB multiple of 8, capped at block_batch) ----
    tb = min(block_batch, _round_up(batch, 8))
    padded_batch = _round_up(batch, tb)
    if padded_batch != batch:
        xc = jnp.zeros((padded_batch, dim_states), compute_dtype).at[:batch].set(xc)
    grid = (padded_batch // tb,)

    const = lambda i: (0, 0)
    out = pl.pallas_call(
        _dqn_kernel,
        out_shape=jax.ShapeDtypeStruct((padded_batch, _OUT_PAD), jnp.float32),
        grid=grid,
        in_specs=[
            pl.BlockSpec((tb, dim_states), lambda i: (i, 0)),          # x: streamed
            pl.BlockSpec((dim_states, _HIDDEN_PAD), const),            # w1: resident
            pl.BlockSpec((1, _HIDDEN_PAD), const),                     # b1
            pl.BlockSpec((_HIDDEN_PAD, _HIDDEN_PAD), const),           # w2
            pl.BlockSpec((1, _HIDDEN_PAD), const),                     # b2
            pl.BlockSpec((_HIDDEN_PAD, _OUT_PAD), const),              # w3
            pl.BlockSpec((1, _OUT_PAD), const),                        # b3
        ],
        out_specs=pl.BlockSpec((tb, _OUT_PAD), lambda i: (i, 0)),
        compiler_params=pltpu.CompilerParams(
            dimension_semantics=("parallel",),  # lets v7x shard batch over both TCs
        ),
    )(xc, w1c, b1p, w2c, b2p, w3c, b3p)

    return out[:batch, :dim_actions]


def init_params(key, dim_states, dim_actions):
    """Deterministic init mirroring PyTorch Linear default: U(-1/sqrt(fan_in), 1/sqrt(fan_in))."""
    ks = jax.random.split(key, 6)

    def linear(kw, kb, fan_in, fan_out):
        bound = 1.0 / jnp.sqrt(jnp.float32(fan_in))
        w = jax.random.uniform(kw, (fan_in, fan_out), jnp.float32, -bound, bound)
        b = jax.random.uniform(kb, (1, fan_out), jnp.float32, -bound, bound)
        return w, b

    w1, b1 = linear(ks[0], ks[1], dim_states, 64)
    w2, b2 = linear(ks[2], ks[3], 64, 64)
    w3, b3 = linear(ks[4], ks[5], 64, dim_actions)
    return w1, b1, w2, b2, w3, b3


def _reference(x, params):
    w1, b1, w2, b2, w3, b3 = params
    h = jnp.maximum(x @ w1 + b1, 0.0)
    h = jnp.maximum(h @ w2 + b2, 0.0)
    return h @ w3 + b3


if __name__ == "__main__":
    key = jax.random.PRNGKey(0)
    k_in, k_in2, k_param = jax.random.split(key, 3)

    batch, dim_states, dim_actions = 8, 16, 4
    x = jax.random.normal(k_in, (batch, dim_states), jnp.float32)
    params = init_params(k_param, dim_states, dim_actions)

    # Exact-path check (f32 compute) — must match the PyTorch-equivalent reference tightly.
    out_f32 = jax.block_until_ready(
        deep_qnetwork_forward(x, *params, compute_dtype=jnp.float32))
    ref = _reference(x, params)
    assert out_f32.shape == (batch, dim_actions)
    assert jnp.allclose(out_f32, ref, atol=1e-5, rtol=1e-5)

    # Performance path (bf16 MXU inputs, default) — loose tolerance vs f32 reference.
    out_bf16 = jax.block_until_ready(deep_qnetwork_forward(x, *params))
    assert jnp.allclose(out_bf16, ref, atol=5e-2, rtol=5e-2)

    # Multi-tile path: batch larger than the block to exercise the grid + batch padding.
    batch2 = 300
    x2 = jax.random.normal(k_in2, (batch2, dim_states), jnp.float32)
    out2 = jax.block_until_ready(
        deep_qnetwork_forward(x2, *params, compute_dtype=jnp.float32, block_batch=128))
    ref2 = _reference(x2, params)
    assert out2.shape == (batch2, dim_actions)
    assert jnp.allclose(out2, ref2, atol=1e-5, rtol=1e-5)

    print("KERNEL_OK")
</pallas_src>

<mosaic_0001>
module attributes {stable_mosaic.version = 11 : i64} {
  func.func @_dqn_kernel(%arg0: i32, %arg1: memref<8x16xf32, #tpu.memory_space<vmem>>, %arg2: memref<16x128xf32, #tpu.memory_space<vmem>>, %arg3: memref<1x128xf32, #tpu.memory_space<vmem>>, %arg4: memref<128x128xf32, #tpu.memory_space<vmem>>, %arg5: memref<1x128xf32, #tpu.memory_space<vmem>>, %arg6: memref<128x128xf32, #tpu.memory_space<vmem>>, %arg7: memref<1x128xf32, #tpu.memory_space<vmem>>, %arg8: memref<8x128xf32, #tpu.memory_space<vmem>>) attributes {dimension_semantics = [#tpu.dimension_semantics<parallel>], iteration_bounds = array<i64: 1>, scalar_prefetch = 0 : i64, scratch_operands = 0 : i64, tpu.core_type = #tpu.core_type<tc>, window_params = [{transform_indices = @transform_0, window_bounds = array<i64: 8, 16>}, {pipeline_mode = #tpu.pipeline_mode<synchronous>, transform_indices = @transform_1, window_bounds = array<i64: 16, 128>}, {pipeline_mode = #tpu.pipeline_mode<synchronous>, transform_indices = @transform_2, window_bounds = array<i64: 1, 128>}, {pipeline_mode = #tpu.pipeline_mode<synchronous>, transform_indices = @transform_3, window_bounds = array<i64: 128, 128>}, {pipeline_mode = #tpu.pipeline_mode<synchronous>, transform_indices = @transform_4, window_bounds = array<i64: 1, 128>}, {pipeline_mode = #tpu.pipeline_mode<synchronous>, transform_indices = @transform_5, window_bounds = array<i64: 128, 128>}, {pipeline_mode = #tpu.pipeline_mode<synchronous>, transform_indices = @transform_6, window_bounds = array<i64: 1, 128>}, {transform_indices = @transform_7, window_bounds = array<i64: 8, 128>}]} {
    %c0 = arith.constant 0 : index
    %c0_0 = arith.constant 0 : index
    %0 = vector.load %arg1[%c0, %c0_0] : memref<8x16xf32, #tpu.memory_space<vmem>>, vector<8x16xf32>
    %c0_1 = arith.constant 0 : index
    %c0_2 = arith.constant 0 : index
    %1 = vector.load %arg2[%c0_1, %c0_2] : memref<16x128xf32, #tpu.memory_space<vmem>>, vector<16x128xf32>
    %cst = arith.constant dense<0.000000e+00> : vector<8x128xf32>
    %2 = tpu.matmul %0, %1, %cst {dimension_numbers = #tpu.dot_dimension_numbers<[1], [0], [0], [1], [0, 0, 1, 1], [], []>} : vector<8x16xf32>, vector<16x128xf32>, vector<8x128xf32> -> vector<8x128xf32>
    %c0_3 = arith.constant 0 : index
    %c0_4 = arith.constant 0 : index
    %3 = vector.load %arg3[%c0_3, %c0_4] : memref<1x128xf32, #tpu.memory_space<vmem>>, vector<1x128xf32>
    %4 = vector.broadcast %3 : vector<1x128xf32> to vector<8x128xf32>
    %5 = arith.addf %2, %4 : vector<8x128xf32>
    %cst_5 = arith.constant 0.000000e+00 : f32
    %6 = vector.broadcast %cst_5 : f32 to vector<8x128xf32>
    %7 = arith.maximumf %5, %6 : vector<8x128xf32>
    %c0_6 = arith.constant 0 : index
    %c0_7 = arith.constant 0 : index
    %8 = vector.load %arg4[%c0_6, %c0_7] : memref<128x128xf32, #tpu.memory_space<vmem>>, vector<128x128xf32>
    %cst_8 = arith.constant dense<0.000000e+00> : vector<8x128xf32>
    %9 = tpu.matmul %7, %8, %cst_8 {dimension_numbers = #tpu.dot_dimension_numbers<[1], [0], [0], [1], [0, 0, 1, 1], [], []>} : vector<8x128xf32>, vector<128x128xf32>, vector<8x128xf32> -> vector<8x128xf32>
    %c0_9 = arith.constant 0 : index
    %c0_10 = arith.constant 0 : index
    %10 = vector.load %arg5[%c0_9, %c0_10] : memref<1x128xf32, #tpu.memory_space<vmem>>, vector<1x128xf32>
    %11 = vector.broadcast %10 : vector<1x128xf32> to vector<8x128xf32>
    %12 = arith.addf %9, %11 : vector<8x128xf32>
    %cst_11 = arith.constant 0.000000e+00 : f32
    %13 = vector.broadcast %cst_11 : f32 to vector<8x128xf32>
    %14 = arith.maximumf %12, %13 : vector<8x128xf32>
    %c0_12 = arith.constant 0 : index
    %c0_13 = arith.constant 0 : index
    %15 = vector.load %arg6[%c0_12, %c0_13] : memref<128x128xf32, #tpu.memory_space<vmem>>, vector<128x128xf32>
    %cst_14 = arith.constant dense<0.000000e+00> : vector<8x128xf32>
    %16 = tpu.matmul %14, %15, %cst_14 {dimension_numbers = #tpu.dot_dimension_numbers<[1], [0], [0], [1], [0, 0, 1, 1], [], []>} : vector<8x128xf32>, vector<128x128xf32>, vector<8x128xf32> -> vector<8x128xf32>
    %c0_15 = arith.constant 0 : index
    %c0_16 = arith.constant 0 : index
    %17 = vector.load %arg7[%c0_15, %c0_16] : memref<1x128xf32, #tpu.memory_space<vmem>>, vector<1x128xf32>
    %18 = vector.broadcast %17 : vector<1x128xf32> to vector<8x128xf32>
    %19 = arith.addf %16, %18 : vector<8x128xf32>
    %c0_17 = arith.constant 0 : index
    %c0_18 = arith.constant 0 : index
    %20 = vector.load %arg8[%c0_17, %c0_18] : memref<8x128xf32, #tpu.memory_space<vmem>>, vector<8x128xf32>
    tpu.vector_store %arg8[%c0_17, %c0_18], %19 {strides = array<i32>} : memref<8x128xf32, #tpu.memory_space<vmem>>, vector<8x128xf32>,
    return
  }
  func.func @transform_0(%arg0: i32) -> (i32, i32) {
    %c0_i32 = arith.constant 0 : i32
    %c0_i32_0 = arith.constant 0 : i32
    return %arg0, %c0_i32 : i32, i32
  }
  func.func @transform_1(%arg0: i32) -> (i32, i32) {
    %c0_i32 = arith.constant 0 : i32
    %c0_i32_0 = arith.constant 0 : i32
    %c0_i32_1 = arith.constant 0 : i32
    return %c0_i32, %c0_i32_0 : i32, i32
  }
  func.func @transform_2(%arg0: i32) -> (i32, i32) {
    %c0_i32 = arith.constant 0 : i32
    %c0_i32_0 = arith.constant 0 : i32
    %c0_i32_1 = arith.constant 0 : i32
    return %c0_i32, %c0_i32_0 : i32, i32
  }
  func.func @transform_3(%arg0: i32) -> (i32, i32) {
    %c0_i32 = arith.constant 0 : i32
    %c0_i32_0 = arith.constant 0 : i32
    %c0_i32_1 = arith.constant 0 : i32
    return %c0_i32, %c0_i32_0 : i32, i32
  }
  func.func @transform_4(%arg0: i32) -> (i32, i32) {
    %c0_i32 = arith.constant 0 : i32
    %c0_i32_0 = arith.constant 0 : i32
    %c0_i32_1 = arith.constant 0 : i32
    return %c0_i32, %c0_i32_0 : i32, i32
  }
  func.func @transform_5(%arg0: i32) -> (i32, i32) {
    %c0_i32 = arith.constant 0 : i32
    %c0_i32_0 = arith.constant 0 : i32
    %c0_i32_1 = arith.constant 0 : i32
    return %c0_i32, %c0_i32_0 : i32, i32
  }
  func.func @transform_6(%arg0: i32) -> (i32, i32) {
    %c0_i32 = arith.constant 0 : i32
    %c0_i32_0 = arith.constant 0 : i32
    %c0_i32_1 = arith.constant 0 : i32
    return %c0_i32, %c0_i32_0 : i32, i32
  }
  func.func @transform_7(%arg0: i32) -> (i32, i32) {
    %c0_i32 = arith.constant 0 : i32
    %c0_i32_0 = arith.constant 0 : i32
    return %arg0, %c0_i32 : i32, i32
  }
}

</mosaic_0001>

<llo_original>
// kernel: deep_qnetwork_forward.1
$region0: #{deep_qnetwork_forward.1}
  #allocation0 [shape = 'u32[]', space=smem, size = 0x4, offset = 0x4, fixed_abs, tag = 'smem constant byte address 0x4 - core index']
  #allocation1 [shape = 'u32[144,128]{1,0:T(1,128)}', space=vmem, size = 0x12000, scoped, tag = 'internal scratch']
  %s0 = inlined_call_operand.vmem [shape: f32[8,16], index: 0, kind: input, shape index: {}]
  %s1 = inlined_call_operand.vmem [shape: f32[16,128], index: 1, kind: input, shape index: {}]
  %s2 = inlined_call_operand.vmem [shape: f32[1,128], index: 2, kind: input, shape index: {}]
  %s3 = inlined_call_operand.vmem [shape: f32[128,128], index: 3, kind: input, shape index: {}]
  %s4 = inlined_call_operand.vmem [shape: f32[1,128], index: 4, kind: input, shape index: {}]
  %s5 = inlined_call_operand.vmem [shape: f32[128,128], index: 5, kind: input, shape index: {}]
  %s6 = inlined_call_operand.vmem [shape: f32[1,128], index: 6, kind: input, shape index: {}]
  %s7 = inlined_call_operand.vmem [shape: f32[8,128], index: 7, kind: output, shape index: {}]
  %s8 = sld [smem:[#allocation0]]
  $region38: #{deep_qnetwork_forward.1} parent=0
    _
  %s10 = ssub.s32 1, %s8
  %s11 = scalar_select 0, %s10, %s8
  // Predicated region
  $region2: #{deep_qnetwork_forward.1} parent=0 // pred_check
    _
  $region3: #{deep_qnetwork_forward.1} parent=0 // pred_check_branch
    %13 = sbr.rel (0) target = $region5
  $region4: #{deep_qnetwork_forward.1} parent=0 // pred_region
    _
  $region5: #{deep_qnetwork_forward.1} parent=0 // pred_fallthru
    _
  // Predicated region
  $region6: #{deep_qnetwork_forward.1} parent=0 // pred_check
    _
  $region7: #{deep_qnetwork_forward.1} parent=0 // pred_check_branch
    %15 = sbr.rel (0) target = $region9
  $region8: #{deep_qnetwork_forward.1} parent=0 // pred_region
    _
  $region9: #{deep_qnetwork_forward.1} parent=0 // pred_fallthru
    _
  // Predicated region
  $region10: #{deep_qnetwork_forward.1} parent=0 // pred_check
    _
  $region11: #{deep_qnetwork_forward.1} parent=0 // pred_check_branch
    %17 = sbr.rel (0) target = $region13
  $region12: #{deep_qnetwork_forward.1} parent=0 // pred_region
    _
  $region13: #{deep_qnetwork_forward.1} parent=0 // pred_fallthru
    _
  // Predicated region
  $region14: #{deep_qnetwork_forward.1} parent=0 // pred_check
    _
  $region15: #{deep_qnetwork_forward.1} parent=0 // pred_check_branch
    %19 = sbr.rel (0) target = $region17
  $region16: #{deep_qnetwork_forward.1} parent=0 // pred_region
    _
  $region17: #{deep_qnetwork_forward.1} parent=0 // pred_fallthru
    _
  // Predicated region
  $region18: #{deep_qnetwork_forward.1} parent=0 // pred_check
    _
  $region19: #{deep_qnetwork_forward.1} parent=0 // pred_check_branch
    %21 = sbr.rel (0) target = $region21
  $region20: #{deep_qnetwork_forward.1} parent=0 // pred_region
    _
  $region21: #{deep_qnetwork_forward.1} parent=0 // pred_fallthru
    _
  // Predicated region
  $region22: #{deep_qnetwork_forward.1} parent=0 // pred_check
    _
  $region23: #{deep_qnetwork_forward.1} parent=0 // pred_check_branch
    %23 = sbr.rel (0) target = $region25
  $region24: #{deep_qnetwork_forward.1} parent=0 // pred_region
    _
  $region25: #{deep_qnetwork_forward.1} parent=0 // pred_fallthru
    _
  // Predicated region
  $region26: #{deep_qnetwork_forward.1} parent=0 // pred_check
    _
  $region27: #{deep_qnetwork_forward.1} parent=0 // pred_check_branch
    %25 = sbr.rel (0) target = $region29
  $region28: #{deep_qnetwork_forward.1} parent=0 // pred_region
    _
  $region29: #{deep_qnetwork_forward.1} parent=0 // pred_fallthru
    _
  %v26 = vld [vmem:[%s0] sm:$0xff]
  %v27 = vld [vmem:[%s1] sm:$0xff]
  %v28 = vld [vmem:[%s1 + $0x8] sm:$0xff]
  %v29 = vld [vmem:[%s2] sm:$0x1]
  %v31 = vlaneseq
  %v32 = vshrl.u32 %v31, 7
  %v33 = vsub.s32 0, %v32
  %v34 = vrot.slane %v29, %v33
  %vm36 = vcmask 130048
  %v38 = vsel %vm36, %v26, 0
  %40 = vmatprep.subr.mxu0 0.0
  %41 = vmatpush1.msra.mxu0 %v27
  %42 = vmatprep.subr.mxu0 0.0
  %43 = vmatpush1.msra.mxu0 %v28
  %44 = vmatprep.subr.mxu0 0.0
  %45 = vmatpush1.msra.mxu0 0.0
  %46 = vmatprep.subr.mxu0 0.0
  %47 = vmatpush1.msra.mxu0 0.0
  %48 = vmatprep.subr.mxu0 0.0
  %49 = vmatpush1.msra.mxu0 0.0
  %50 = vmatprep.subr.mxu0 0.0
  %51 = vmatpush1.msra.mxu0 0.0
  %52 = vmatprep.subr.mxu0 0.0
  %53 = vmatpush1.msra.mxu0 0.0
  %54 = vmatprep.subr.mxu0 0.0
  %55 = vmatpush1.msra.mxu0 0.0
  %56 = vmatprep.subr.mxu0 0.0
  %57 = vmatpush1.msra.mxu0 0.0
  %58 = vmatprep.subr.mxu0 0.0
  %59 = vmatpush1.msra.mxu0 0.0
  %60 = vmatprep.subr.mxu0 0.0
  %61 = vmatpush1.msra.mxu0 0.0
  %62 = vmatprep.subr.mxu0 0.0
  %63 = vmatpush1.msra.mxu0 0.0
  %64 = vmatprep.subr.mxu0 0.0
  %65 = vmatpush1.msra.mxu0 0.0
  %66 = vmatprep.subr.mxu0 0.0
  %67 = vmatpush1.msra.mxu0 0.0
  %68 = vmatprep.subr.mxu0 0.0
  %69 = vmatpush1.msra.mxu0 0.0
  %70 = vmatprep.subr.mxu0 0.0
  %71 = vmatpush1.msra.mxu0 0.0
  %72 = vmatprep.subr.mxu0 0.0
  %73 = vmatpush1.msra.mxu0 0.0
  %74 = vmatprep.subr.mxu0 0.0
  %75 = vmatpush1.msra.mxu0 0.0
  %76 = vmatprep.subr.mxu0 0.0
  %77 = vmatpush1.msra.mxu0 0.0
  %78 = vmatprep.subr.mxu0 0.0
  %79 = vmatpush1.msra.mxu0 0.0
  %80 = vmatprep.subr.mxu0 0.0
  %81 = vmatpush1.msra.mxu0 0.0
  %82 = vmatprep.subr.mxu0 0.0
  %83 = vmatpush1.msra.mxu0 0.0
  %84 = vmatprep.subr.mxu0 0.0
  %85 = vmatpush1.msra.mxu0 0.0
  %86 = vmatprep.subr.mxu0 0.0
  %87 = vmatpush1.msra.mxu0 0.0
  %88 = vmatprep.subr.mxu0 0.0
  %89 = vmatpush1.msra.mxu0 0.0
  %90 = vmatprep.subr.mxu0 0.0
  %91 = vmatpush1.msra.mxu0 0.0
  %92 = vmatprep.subr.mxu0 0.0
  %93 = vmatpush1.msra.mxu0 0.0
  %94 = vmatprep.subr.mxu0 0.0
  %95 = vmatpush1.msra.mxu0 0.0
  %96 = vmatprep.subr.mxu0 0.0
  %97 = vmatpush1.msra.mxu0 0.0
  %98 = vmatprep.subr.mxu0 0.0
  %99 = vmatpush1.msra.mxu0 0.0
  %100 = vmatprep.subr.mxu0 0.0
  %101 = vmatpush1.msra.mxu0 0.0
  %102 = vmatprep.subr.mxu0 0.0
  %103 = vmatpush1.msra.mxu0 0.0
  %104 = vmatprep.mubr.f32.mxu0 0.0
  %105 = vmatmul.mubr.f32.gmra.mrb[0].mxu0 %v38
  %v106 = vpop.f32.mrb[0].mxu0
  %v107 = vadd.f32 %v34, %v106
  %v108 = vpop.f32.mrb[0].mxu0
  %109 = vdwg.mxu0
  %v110 = vmax.f32 %v107, 0.0
  %v111 = vld [vmem:[%s3] sm:$0xff]
  %v112 = vld [vmem:[%s3 + $0x8] sm:$0xff]
  %v113 = vld [vmem:[%s3 + $0x10] sm:$0xff]
  %v114 = vld [vmem:[%s3 + $0x18] sm:$0xff]
  %v115 = vld [vmem:[%s3 + $0x20] sm:$0xff]
  %v116 = vld [vmem:[%s3 + $0x28] sm:$0xff]
  %v117 = vld [vmem:[%s3 + $0x30] sm:$0xff]
  %v118 = vld [vmem:[%s3 + $0x38] sm:$0xff]
  %v119 = vld [vmem:[%s3 + $0x40] sm:$0xff]
  %v120 = vld [vmem:[%s3 + $0x48] sm:$0xff]
  %v121 = vld [vmem:[%s3 + $0x50] sm:$0xff]
  %v122 = vld [vmem:[%s3 + $0x58] sm:$0xff]
  %v123 = vld [vmem:[%s3 + $0x60] sm:$0xff]
  %v124 = vld [vmem:[%s3 + $0x68] sm:$0xff]
  %v125 = vld [vmem:[%s3 + $0x70] sm:$0xff]
  %v126 = vld [vmem:[%s3 + $0x78] sm:$0xff]
  %v127 = vld [vmem:[%s4] sm:$0x1]
  %v129 = vlaneseq
  %v130 = vshrl.u32 %v129, 7
  %v131 = vsub.s32 0, %v130
  %v132 = vrot.slane %v127, %v131
  %134 = vmatprep.subr.mxu0 0.0
  %135 = vmatpush1.msra.mxu0 %v111
  %136 = vmatprep.subr.mxu0 0.0
  %137 = vmatpush1.msra.mxu0 %v112
  %138 = vmatprep.subr.mxu0 0.0
  %139 = vmatpush1.msra.mxu0 %v113
  %140 = vmatprep.subr.mxu0 0.0
  %141 = vmatpush1.msra.mxu0 %v114
  %142 = vmatprep.subr.mxu0 0.0
  %143 = vmatpush1.msra.mxu0 %v115
  %144 = vmatprep.subr.mxu0 0.0
  %145 = vmatpush1.msra.mxu0 %v116
  %146 = vmatprep.subr.mxu0 0.0
  %147 = vmatpush1.msra.mxu0 %v117
  %148 = vmatprep.subr.mxu0 0.0
  %149 = vmatpush1.msra.mxu0 %v118
  %150 = vmatprep.subr.mxu0 0.0
  %151 = vmatpush1.msra.mxu0 %v119
  %152 = vmatprep.subr.mxu0 0.0
  %153 = vmatpush1.msra.mxu0 %v120
  %154 = vmatprep.subr.mxu0 0.0
  %155 = vmatpush1.msra.mxu0 %v121
  %156 = vmatprep.subr.mxu0 0.0
  %157 = vmatpush1.msra.mxu0 %v122
  %158 = vmatprep.subr.mxu0 0.0
  %159 = vmatpush1.msra.mxu0 %v123
  %160 = vmatprep.subr.mxu0 0.0
  %161 = vmatpush1.msra.mxu0 %v124
  %162 = vmatprep.subr.mxu0 0.0
  %163 = vmatpush1.msra.mxu0 %v125
  %164 = vmatprep.subr.mxu0 0.0
  %165 = vmatpush1.msra.mxu0 %v126
  %166 = vmatprep.subr.mxu0 0.0
  %167 = vmatpush1.msra.mxu0 0.0
  %168 = vmatprep.subr.mxu0 0.0
  %169 = vmatpush1.msra.mxu0 0.0
  %170 = vmatprep.subr.mxu0 0.0
  %171 = vmatpush1.msra.mxu0 0.0
  %172 = vmatprep.subr.mxu0 0.0
  %173 = vmatpush1.msra.mxu0 0.0
  %174 = vmatprep.subr.mxu0 0.0
  %175 = vmatpush1.msra.mxu0 0.0
  %176 = vmatprep.subr.mxu0 0.0
  %177 = vmatpush1.msra.mxu0 0.0
  %178 = vmatprep.subr.mxu0 0.0
  %179 = vmatpush1.msra.mxu0 0.0
  %180 = vmatprep.subr.mxu0 0.0
  %181 = vmatpush1.msra.mxu0 0.0
  %182 = vmatprep.subr.mxu0 0.0
  %183 = vmatpush1.msra.mxu0 0.0
  %184 = vmatprep.subr.mxu0 0.0
  %185 = vmatpush1.msra.mxu0 0.0
  %186 = vmatprep.subr.mxu0 0.0
  %187 = vmatpush1.msra.mxu0 0.0
  %188 = vmatprep.subr.mxu0 0.0
  %189 = vmatpush1.msra.mxu0 0.0
  %190 = vmatprep.subr.mxu0 0.0
  %191 = vmatpush1.msra.mxu0 0.0
  %192 = vmatprep.subr.mxu0 0.0
  %193 = vmatpush1.msra.mxu0 0.0
  %194 = vmatprep.subr.mxu0 0.0
  %195 = vmatpush1.msra.mxu0 0.0
  %196 = vmatprep.subr.mxu0 0.0
  %197 = vmatpush1.msra.mxu0 0.0
  %198 = vmatprep.mubr.f32.mxu0 0.0
  %199 = vmatmul.mubr.f32.gmra.mrb[0].mxu0 %v110
  %v200 = vpop.f32.mrb[0].mxu0
  %v201 = vadd.f32 %v132, %v200
  %v202 = vpop.f32.mrb[0].mxu0
  %203 = vdwg.mxu0
  %v204 = vmax.f32 %v201, 0.0
  %v205 = vld [vmem:[%s5] sm:$0xff]
  %v206 = vld [vmem:[%s5 + $0x8] sm:$0xff]
  %v207 = vld [vmem:[%s5 + $0x10] sm:$0xff]
  %v208 = vld [vmem:[%s5 + $0x18] sm:$0xff]
  %v209 = vld [vmem:[%s5 + $0x20] sm:$0xff]
  %v210 = vld [vmem:[%s5 + $0x28] sm:$0xff]
  %v211 = vld [vmem:[%s5 + $0x30] sm:$0xff]
  %v212 = vld [vmem:[%s5 + $0x38] sm:$0xff]
  %v213 = vld [vmem:[%s5 + $0x40] sm:$0xff]
  %v214 = vld [vmem:[%s5 + $0x48] sm:$0xff]
  %v215 = vld [vmem:[%s5 + $0x50] sm:$0xff]
  %v216 = vld [vmem:[%s5 + $0x58] sm:$0xff]
  %v217 = vld [vmem:[%s5 + $0x60] sm:$0xff]
  %v218 = vld [vmem:[%s5 + $0x68] sm:$0xff]
  %v219 = vld [vmem:[%s5 + $0x70] sm:$0xff]
  %v220 = vld [vmem:[%s5 + $0x78] sm:$0xff]
  %v221 = vld [vmem:[%s6] sm:$0x1]
  %v223 = vlaneseq
  %v224 = vshrl.u32 %v223, 7
  %v225 = vsub.s32 0, %v224
  %v226 = vrot.slane %v221, %v225
  %228 = vmatprep.subr.mxu0 0.0
  %229 = vmatpush1.msra.mxu0 %v205
  %230 = vmatprep.subr.mxu0 0.0
  %231 = vmatpush1.msra.mxu0 %v206
  %232 = vmatprep.subr.mxu0 0.0
  %233 = vmatpush1.msra.mxu0 %v207
  %234 = vmatprep.subr.mxu0 0.0
  %235 = vmatpush1.msra.mxu0 %v208
  %236 = vmatprep.subr.mxu0 0.0
  %237 = vmatpush1.msra.mxu0 %v209
  %238 = vmatprep.subr.mxu0 0.0
  %239 = vmatpush1.msra.mxu0 %v210
  %240 = vmatprep.subr.mxu0 0.0
  %241 = vmatpush1.msra.mxu0 %v211
  %242 = vmatprep.subr.mxu0 0.0
  %243 = vmatpush1.msra.mxu0 %v212
  %244 = vmatprep.subr.mxu0 0.0
  %245 = vmatpush1.msra.mxu0 %v213
  %246 = vmatprep.subr.mxu0 0.0
  %247 = vmatpush1.msra.mxu0 %v214
  %248 = vmatprep.subr.mxu0 0.0
  %249 = vmatpush1.msra.mxu0 %v215
  %250 = vmatprep.subr.mxu0 0.0
  %251 = vmatpush1.msra.mxu0 %v216
  %252 = vmatprep.subr.mxu0 0.0
  %253 = vmatpush1.msra.mxu0 %v217
  %254 = vmatprep.subr.mxu0 0.0
  %255 = vmatpush1.msra.mxu0 %v218
  %256 = vmatprep.subr.mxu0 0.0
  %257 = vmatpush1.msra.mxu0 %v219
  %258 = vmatprep.subr.mxu0 0.0
  %259 = vmatpush1.msra.mxu0 %v220
  %260 = vmatprep.subr.mxu0 0.0
  %261 = vmatpush1.msra.mxu0 0.0
  %262 = vmatprep.subr.mxu0 0.0
  %263 = vmatpush1.msra.mxu0 0.0
  %264 = vmatprep.subr.mxu0 0.0
  %265 = vmatpush1.msra.mxu0 0.0
  %266 = vmatprep.subr.mxu0 0.0
  %267 = vmatpush1.msra.mxu0 0.0
  %268 = vmatprep.subr.mxu0 0.0
  %269 = vmatpush1.msra.mxu0 0.0
  %270 = vmatprep.subr.mxu0 0.0
  %271 = vmatpush1.msra.mxu0 0.0
  %272 = vmatprep.subr.mxu0 0.0
  %273 = vmatpush1.msra.mxu0 0.0
  %274 = vmatprep.subr.mxu0 0.0
  %275 = vmatpush1.msra.mxu0 0.0
  %276 = vmatprep.subr.mxu0 0.0
  %277 = vmatpush1.msra.mxu0 0.0
  %278 = vmatprep.subr.mxu0 0.0
  %279 = vmatpush1.msra.mxu0 0.0
  %280 = vmatprep.subr.mxu0 0.0
  %281 = vmatpush1.msra.mxu0 0.0
  %282 = vmatprep.subr.mxu0 0.0
  %283 = vmatpush1.msra.mxu0 0.0
  %284 = vmatprep.subr.mxu0 0.0
  %285 = vmatpush1.msra.mxu0 0.0
  %286 = vmatprep.subr.mxu0 0.0
  %287 = vmatpush1.msra.mxu0 0.0
  %288 = vmatprep.subr.mxu0 0.0
  %289 = vmatpush1.msra.mxu0 0.0
  %290 = vmatprep.subr.mxu0 0.0
  %291 = vmatpush1.msra.mxu0 0.0
  %292 = vmatprep.mubr.f32.mxu0 0.0
  %293 = vmatmul.mubr.f32.gmra.mrb[0].mxu0 %v204
  %v294 = vpop.f32.mrb[0].mxu0
  %v295 = vadd.f32 %v226, %v294
  %v296 = vpop.f32.mrb[0].mxu0
  %297 = vdwg.mxu0
  %298 = vst [vmem:[%s7] sm:$0xff] %v295
  // Predicated region
  $region30: #{deep_qnetwork_forward.1} parent=0 // pred_check
    _
  $region31: #{deep_qnetwork_forward.1} parent=0 // pred_check_branch
    %300 = sbr.rel (0) target = $region33
  $region32: #{deep_qnetwork_forward.1} parent=0 // pred_region
    _
  $region33: #{deep_qnetwork_forward.1} parent=0 // pred_fallthru
    _
  // Predicated region
  $region34: #{deep_qnetwork_forward.1} parent=0 // pred_check
    _
  $region35: #{deep_qnetwork_forward.1} parent=0 // pred_check_branch
    %302 = sbr.rel (0) target = $region37
  $region36: #{deep_qnetwork_forward.1} parent=0 // pred_region
    _
  $region37: #{deep_qnetwork_forward.1} parent=0 // pred_fallthru
    _

</llo_original>
